<compile_context>
chip_gen: v6e
topology: v6e:2x2x1
jax: 0.10.0
libtpu: 0.0.40
codegen_flags: <defaults>
</compile_context>

<pallas_src>
import functools

import jax
import jax.numpy as jnp
from jax.experimental import pallas as pl
from jax.experimental.pallas import tpu as pltpu


def _min_rows(dtype) -> int:
    """Minimum second-minor tile rows for a dtype: 8 (f32), 16 (bf16), 32 (int8)."""
    return 8 * max(1, 4 // jnp.dtype(dtype).itemsize)


def _embedding_gather_kernel(ids_ref, table_ref, out_ref, row_buf, sems, *,
                             tok_block, blocks_per_core, sem_pool):
    """Gather one (tok_block, H) tile of embedding rows, double-buffered across steps.

    ids_ref  : SMEM (n_blocks*tok_block,) int32 -- token-major flat ids (prefetched)
    table_ref: HBM  (vocab, H)                  -- memory_space=pl.ANY, manual DMA
    out_ref  : VMEM (tok_block, H)              -- current output tile
    row_buf  : VMEM (2, tok_block, H)           -- double-buffered staging (table dtype)
    sems     : DMA sems (2, sem_pool)           -- small round-robin pool per slot
    """
    core = pl.program_id(0)            # "parallel" axis (sharded across TCs on v7x)
    i = pl.program_id(1)               # per-core step (restarts at 0 on every core)
    blk = core * blocks_per_core + i   # flat block index into ids / output rows

    def issue(block_idx, slot):
        base = block_idx * tok_block
        for j in range(tok_block):                         # static unroll
            tok = ids_ref[base + j]                        # scalar SMEM read
            pltpu.make_async_copy(
                table_ref.at[pl.ds(tok, 1)],               # (1, H) row in HBM
                row_buf.at[slot, pl.ds(j, 1)],             # (1, H) staging row
                sems.at[slot, j % sem_pool]).start()

    def wait_all(slot):
        for j in range(tok_block):                         # shape/sem-matched waiters
            pltpu.make_async_copy(
                table_ref.at[pl.ds(0, 1)],
                row_buf.at[slot, pl.ds(j, 1)],
                sems.at[slot, j % sem_pool]).wait()

    slot = i % 2
    nxt = (i + 1) % 2

    @pl.when(i == 0)                   # per-core priming (safe under "parallel")
    def _():
        issue(blk, slot)

    @pl.when(i + 1 < blocks_per_core)  # prefetch next step's rows before waiting
    def _():
        issue(blk + 1, nxt)

    wait_all(slot)
    # fused fp32_residual_connection cast + lane-dense (tok_block, H) store
    out_ref[...] = row_buf[slot].astype(out_ref.dtype)


def chatglm_embedding(input_ids, table, *, fp32_residual_connection=True,
                      tok_block=64, num_cores=1):
    """input_ids: (B, S) int; table: (vocab, H).
    Returns (S, B, H), float32 if fp32_residual_connection else table dtype."""
    B, S = input_ids.shape
    V, H = table.shape
    assert H % 128 == 0, "hidden_size must be lane-dense (multiple of 128)"
    out_dtype = jnp.float32 if fp32_residual_connection else table.dtype
    # (8,128)/(16,128)/(32,128) tile rule: tok_block must cover the sublane pack
    # factor of both the staging (table) dtype and the output dtype.
    assert tok_block % max(_min_rows(table.dtype), _min_rows(out_dtype)) == 0

    n_tok = B * S
    # Token-major flat ids (t = s*B + b): the final reshape to (S,B,H) is free,
    # i.e. torch's transpose(0,1).contiguous() is fused into the kernel.
    ids = jnp.transpose(input_ids.astype(jnp.int32)).reshape(-1)
    # Clamp so a bad id can never drive an out-of-bounds HBM DMA (torch would be UB).
    ids = jnp.clip(ids, 0, V - 1)

    # Pad the token count to whole (num_cores x tok_block) blocks; padding tokens
    # gather row 0 and are sliced off below (handles ragged seq*batch).
    n_blocks = pl.cdiv(pl.cdiv(n_tok, tok_block), num_cores) * num_cores
    n_pad = n_blocks * tok_block
    ids = jnp.pad(ids, (0, n_pad - n_tok))
    blocks_per_core = n_blocks // num_cores
    sem_pool = min(8, tok_block)

    kern = functools.partial(_embedding_gather_kernel, tok_block=tok_block,
                             blocks_per_core=blocks_per_core, sem_pool=sem_pool)

    # VMEM budget: double-buffered staging + double-buffered output tile (+ slack).
    vmem_bytes = 2 * tok_block * H * (table.dtype.itemsize
                                      + jnp.dtype(out_dtype).itemsize)
    vmem_limit = int(min(64 << 20, max(2 * vmem_bytes + (1 << 20), 4 << 20)))

    flat = pl.pallas_call(
        kern,
        out_shape=jax.ShapeDtypeStruct((n_pad, H), out_dtype),
        grid_spec=pltpu.PrefetchScalarGridSpec(
            num_scalar_prefetch=1,                          # ids -> SMEM
            grid=(num_cores, blocks_per_core),
            in_specs=[pl.BlockSpec(memory_space=pl.ANY)],   # table stays in HBM
            out_specs=pl.BlockSpec(
                (tok_block, H),
                lambda c, i, ids_ref: (c * blocks_per_core + i, 0)),
            scratch_shapes=[pltpu.VMEM((2, tok_block, H), table.dtype),
                            pltpu.SemaphoreType.DMA((2, sem_pool))]),
        compiler_params=pltpu.CompilerParams(
            dimension_semantics=("parallel", "arbitrary"),
            vmem_limit_bytes=vmem_limit),
        cost_estimate=pl.CostEstimate(
            flops=0, transcendentals=0,
            bytes_accessed=n_pad * H * (table.dtype.itemsize
                                        + jnp.dtype(out_dtype).itemsize)
                           + n_pad * 4),
    )(ids, table)

    # Rows are already token-major: slicing off padding + reshape is free metadata.
    return flat[:n_tok].reshape(S, B, H)


# ----------------------------- demo / correctness -----------------------------

if __name__ == "__main__":
    key = jax.random.PRNGKey(0)
    k1, k2, k3, k4 = jax.random.split(key, 4)

    def reference(ids, table, fp32=True):
        e = jnp.take(table, ids, axis=0)          # nn.Embedding lookup -> (B,S,H)
        e = jnp.transpose(e, (1, 0, 2))           # .transpose(0,1)     -> (S,B,H)
        return e.astype(jnp.float32) if fp32 else e

    # Test 1: tiny shapes, small block -> multi-step grid exercises the
    # cross-step double buffering and pipeline priming.
    V1, H1, B1, S1 = 128, 128, 2, 8
    tab1 = 0.02 * jax.random.normal(k1, (V1, H1), jnp.float32)
    ids1 = jax.random.randint(k2, (B1, S1), 0, V1, dtype=jnp.int32)
    out1 = jax.block_until_ready(
        chatglm_embedding(ids1, tab1, fp32_residual_connection=True,
                          tok_block=8, num_cores=1))
    ref1 = reference(ids1, tab1, True)
    assert out1.shape == (S1, B1, H1) and out1.dtype == jnp.float32
    assert jnp.allclose(out1, ref1), "embedding mismatch (test 1)"

    # Test 2: 64-token blocks, ragged token count (padding path) and a 2-way
    # "parallel" core axis (uses both TensorCores on v7x, still correct on one).
    V2, H2, B2, S2 = 512, 256, 4, 60
    tab2 = 0.02 * jax.random.normal(k3, (V2, H2), jnp.float32)
    ids2 = jax.random.randint(k4, (B2, S2), 0, V2, dtype=jnp.int32)
    out2 = jax.block_until_ready(
        chatglm_embedding(ids2, tab2, fp32_residual_connection=True,
                          tok_block=64, num_cores=2))
    ref2 = reference(ids2, tab2, True)
    assert out2.shape == (S2, B2, H2) and out2.dtype == jnp.float32
    assert jnp.allclose(out2, ref2), "embedding mismatch (test 2)"

    print("KERNEL_OK")
</pallas_src>

<mosaic_0001>
module attributes {stable_mosaic.version = 11 : i64} {
  func.func @_embedding_gather_kernel(%arg0: i32, %arg1: i32, %arg2: memref<16xi32, #tpu.memory_space<smem>>, %arg3: memref<128x128xf32, #tpu.memory_space<any>>, %arg4: memref<8x128xf32, #tpu.memory_space<vmem>>, %arg5: memref<2x8x128xf32, #tpu.memory_space<vmem>>, %arg6: memref<2x8x!tpu.dma_semaphore, #tpu.memory_space<semaphore_mem>>) attributes {dimension_semantics = [#tpu.dimension_semantics<parallel>, #tpu.dimension_semantics<arbitrary>], iteration_bounds = array<i64: 1, 2>, scalar_prefetch = 1 : i64, scratch_operands = 2 : i64, tpu.core_type = #tpu.core_type<tc>, window_params = [{}, {transform_indices = @transform_1, window_bounds = array<i64: 8, 128>}]} {
    %c2_i32 = arith.constant 2 : i32
    %0 = arith.muli %arg0, %c2_i32 : i32
    %1 = arith.addi %0, %arg1 : i32
    %c2_i32_0 = arith.constant 2 : i32
    %c0_i32 = arith.constant 0 : i32
    %2 = arith.cmpi eq, %c2_i32_0, %c0_i32 : i32
    %c1_i32 = arith.constant 1 : i32
    %3 = arith.select %2, %c1_i32, %c2_i32_0 : i32
    %4 = arith.remsi %arg1, %3 : i32
    %c0_i32_1 = arith.constant 0 : i32
    %5 = arith.cmpi ne, %4, %c0_i32_1 : i32
    %c0_i32_2 = arith.constant 0 : i32
    %6 = arith.cmpi slt, %4, %c0_i32_2 : i32
    %c0_i32_3 = arith.constant 0 : i32
    %7 = arith.cmpi slt, %3, %c0_i32_3 : i32
    %8 = arith.xori %6, %7 : i1
    %9 = arith.andi %8, %5 : i1
    %10 = arith.addi %4, %3 : i32
    %11 = arith.select %9, %10, %4 : i32
    %c1_i32_4 = arith.constant 1 : i32
    %12 = arith.addi %arg1, %c1_i32_4 : i32
    %c2_i32_5 = arith.constant 2 : i32
    %c0_i32_6 = arith.constant 0 : i32
    %13 = arith.cmpi eq, %c2_i32_5, %c0_i32_6 : i32
    %c1_i32_7 = arith.constant 1 : i32
    %14 = arith.select %13, %c1_i32_7, %c2_i32_5 : i32
    %15 = arith.remsi %12, %14 : i32
    %c0_i32_8 = arith.constant 0 : i32
    %16 = arith.cmpi ne, %15, %c0_i32_8 : i32
    %c0_i32_9 = arith.constant 0 : i32
    %17 = arith.cmpi slt, %15, %c0_i32_9 : i32
    %c0_i32_10 = arith.constant 0 : i32
    %18 = arith.cmpi slt, %14, %c0_i32_10 : i32
    %19 = arith.xori %17, %18 : i1
    %20 = arith.andi %19, %16 : i1
    %21 = arith.addi %15, %14 : i32
    %22 = arith.select %20, %21, %15 : i32
    %c0_i32_11 = arith.constant 0 : i32
    %23 = arith.cmpi eq, %arg1, %c0_i32_11 : i32
    %24 = arith.extui %23 : i1 to i32
    %c0_i32_12 = arith.constant 0 : i32
    %25 = arith.cmpi ne, %24, %c0_i32_12 : i32
    scf.if %25 {
      %c8_i32 = arith.constant 8 : i32
      %74 = arith.muli %1, %c8_i32 : i32
      %c0_i32_54 = arith.constant 0 : i32
      %75 = arith.addi %74, %c0_i32_54 : i32
      %76 = arith.index_cast %75 : i32 to index
      %77 = memref.load %arg2[%76] : memref<16xi32, #tpu.memory_space<smem>>
      %c0_i32_55 = arith.constant 0 : i32
      %c0_i32_56 = arith.constant 0 : i32
      %78 = tpu.memref_slice %arg3[%77, %c0_i32_56] : memref<128x128xf32, #tpu.memory_space<any>> -> memref<1x128xf32, #tpu.memory_space<any>>
      %c0_i32_57 = arith.constant 0 : i32
      %c0_i32_58 = arith.constant 0 : i32
      %79 = tpu.memref_slice %arg5[%11, %c0_i32_57, %c0_i32_58] : memref<2x8x128xf32, #tpu.memory_space<vmem>> -> memref<1x1x128xf32, #tpu.memory_space<vmem>>
      %80 = tpu.memref_squeeze %79 : memref<1x1x128xf32, #tpu.memory_space<vmem>> -> memref<1x128xf32, #tpu.memory_space<vmem>>
      %81 = tpu.memref_slice %arg6[%11, %c0_i32_55] : memref<2x8x!tpu.dma_semaphore, #tpu.memory_space<semaphore_mem>> -> memref<1x1x!tpu.dma_semaphore, #tpu.memory_space<semaphore_mem>>
      %82 = tpu.memref_squeeze %81 : memref<1x1x!tpu.dma_semaphore, #tpu.memory_space<semaphore_mem>> -> memref<!tpu.dma_semaphore, #tpu.memory_space<semaphore_mem>>
      tpu.enqueue_dma source(%78 : memref<1x128xf32, #tpu.memory_space<any>>) target(%80 : memref<1x128xf32, #tpu.memory_space<vmem>>) target_semaphore(%82 : memref<!tpu.dma_semaphore, #tpu.memory_space<semaphore_mem>>)
      %c1_i32_59 = arith.constant 1 : i32
      %83 = arith.addi %74, %c1_i32_59 : i32
      %84 = arith.index_cast %83 : i32 to index
      %85 = memref.load %arg2[%84] : memref<16xi32, #tpu.memory_space<smem>>
      %c1_i32_60 = arith.constant 1 : i32
      %c0_i32_61 = arith.constant 0 : i32
      %86 = tpu.memref_slice %arg3[%85, %c0_i32_61] : memref<128x128xf32, #tpu.memory_space<any>> -> memref<1x128xf32, #tpu.memory_space<any>>
      %c1_i32_62 = arith.constant 1 : i32
      %c0_i32_63 = arith.constant 0 : i32
      %87 = tpu.memref_slice %arg5[%11, %c1_i32_62, %c0_i32_63] : memref<2x8x128xf32, #tpu.memory_space<vmem>> -> memref<1x1x128xf32, #tpu.memory_space<vmem>>
      %88 = tpu.memref_squeeze %87 : memref<1x1x128xf32, #tpu.memory_space<vmem>> -> memref<1x128xf32, #tpu.memory_space<vmem>>
      %89 = tpu.memref_slice %arg6[%11, %c1_i32_60] : memref<2x8x!tpu.dma_semaphore, #tpu.memory_space<semaphore_mem>> -> memref<1x1x!tpu.dma_semaphore, #tpu.memory_space<semaphore_mem>>
      %90 = tpu.memref_squeeze %89 : memref<1x1x!tpu.dma_semaphore, #tpu.memory_space<semaphore_mem>> -> memref<!tpu.dma_semaphore, #tpu.memory_space<semaphore_mem>>
      tpu.enqueue_dma source(%86 : memref<1x128xf32, #tpu.memory_space<any>>) target(%88 : memref<1x128xf32, #tpu.memory_space<vmem>>) target_semaphore(%90 : memref<!tpu.dma_semaphore, #tpu.memory_space<semaphore_mem>>)
      %c2_i32_64 = arith.constant 2 : i32
      %91 = arith.addi %74, %c2_i32_64 : i32
      %92 = arith.index_cast %91 : i32 to index
      %93 = memref.load %arg2[%92] : memref<16xi32, #tpu.memory_space<smem>>
      %c2_i32_65 = arith.constant 2 : i32
      %c0_i32_66 = arith.constant 0 : i32
      %94 = tpu.memref_slice %arg3[%93, %c0_i32_66] : memref<128x128xf32, #tpu.memory_space<any>> -> memref<1x128xf32, #tpu.memory_space<any>>
      %c2_i32_67 = arith.constant 2 : i32
      %c0_i32_68 = arith.constant 0 : i32
      %95 = tpu.memref_slice %arg5[%11, %c2_i32_67, %c0_i32_68] : memref<2x8x128xf32, #tpu.memory_space<vmem>> -> memref<1x1x128xf32, #tpu.memory_space<vmem>>
      %96 = tpu.memref_squeeze %95 : memref<1x1x128xf32, #tpu.memory_space<vmem>> -> memref<1x128xf32, #tpu.memory_space<vmem>>
      %97 = tpu.memref_slice %arg6[%11, %c2_i32_65] : memref<2x8x!tpu.dma_semaphore, #tpu.memory_space<semaphore_mem>> -> memref<1x1x!tpu.dma_semaphore, #tpu.memory_space<semaphore_mem>>
      %98 = tpu.memref_squeeze %97 : memref<1x1x!tpu.dma_semaphore, #tpu.memory_space<semaphore_mem>> -> memref<!tpu.dma_semaphore, #tpu.memory_space<semaphore_mem>>
      tpu.enqueue_dma source(%94 : memref<1x128xf32, #tpu.memory_space<any>>) target(%96 : memref<1x128xf32, #tpu.memory_space<vmem>>) target_semaphore(%98 : memref<!tpu.dma_semaphore, #tpu.memory_space<semaphore_mem>>)
      %c3_i32_69 = arith.constant 3 : i32
      %99 = arith.addi %74, %c3_i32_69 : i32
      %100 = arith.index_cast %99 : i32 to index
      %101 = memref.load %arg2[%100] : memref<16xi32, #tpu.memory_space<smem>>
      %c3_i32_70 = arith.constant 3 : i32
      %c0_i32_71 = arith.constant 0 : i32
      %102 = tpu.memref_slice %arg3[%101, %c0_i32_71] : memref<128x128xf32, #tpu.memory_space<any>> -> memref<1x128xf32, #tpu.memory_space<any>>
      %c3_i32_72 = arith.constant 3 : i32
      %c0_i32_73 = arith.constant 0 : i32
      %103 = tpu.memref_slice %arg5[%11, %c3_i32_72, %c0_i32_73] : memref<2x8x128xf32, #tpu.memory_space<vmem>> -> memref<1x1x128xf32, #tpu.memory_space<vmem>>
      %104 = tpu.memref_squeeze %103 : memref<1x1x128xf32, #tpu.memory_space<vmem>> -> memref<1x128xf32, #tpu.memory_space<vmem>>
      %105 = tpu.memref_slice %arg6[%11, %c3_i32_70] : memref<2x8x!tpu.dma_semaphore, #tpu.memory_space<semaphore_mem>> -> memref<1x1x!tpu.dma_semaphore, #tpu.memory_space<semaphore_mem>>
      %106 = tpu.memref_squeeze %105 : memref<1x1x!tpu.dma_semaphore, #tpu.memory_space<semaphore_mem>> -> memref<!tpu.dma_semaphore, #tpu.memory_space<semaphore_mem>>
      tpu.enqueue_dma source(%102 : memref<1x128xf32, #tpu.memory_space<any>>) target(%104 : memref<1x128xf32, #tpu.memory_space<vmem>>) target_semaphore(%106 : memref<!tpu.dma_semaphore, #tpu.memory_space<semaphore_mem>>)
      %c4_i32_74 = arith.constant 4 : i32
      %107 = arith.addi %74, %c4_i32_74 : i32
      %108 = arith.index_cast %107 : i32 to index
      %109 = memref.load %arg2[%108] : memref<16xi32, #tpu.memory_space<smem>>
      %c4_i32_75 = arith.constant 4 : i32
      %c0_i32_76 = arith.constant 0 : i32
      %110 = tpu.memref_slice %arg3[%109, %c0_i32_76] : memref<128x128xf32, #tpu.memory_space<any>> -> memref<1x128xf32, #tpu.memory_space<any>>
      %c4_i32_77 = arith.constant 4 : i32
      %c0_i32_78 = arith.constant 0 : i32
      %111 = tpu.memref_slice %arg5[%11, %c4_i32_77, %c0_i32_78] : memref<2x8x128xf32, #tpu.memory_space<vmem>> -> memref<1x1x128xf32, #tpu.memory_space<vmem>>
      %112 = tpu.memref_squeeze %111 : memref<1x1x128xf32, #tpu.memory_space<vmem>> -> memref<1x128xf32, #tpu.memory_space<vmem>>
      %113 = tpu.memref_slice %arg6[%11, %c4_i32_75] : memref<2x8x!tpu.dma_semaphore, #tpu.memory_space<semaphore_mem>> -> memref<1x1x!tpu.dma_semaphore, #tpu.memory_space<semaphore_mem>>
      %114 = tpu.memref_squeeze %113 : memref<1x1x!tpu.dma_semaphore, #tpu.memory_space<semaphore_mem>> -> memref<!tpu.dma_semaphore, #tpu.memory_space<semaphore_mem>>
      tpu.enqueue_dma source(%110 : memref<1x128xf32, #tpu.memory_space<any>>) target(%112 : memref<1x128xf32, #tpu.memory_space<vmem>>) target_semaphore(%114 : memref<!tpu.dma_semaphore, #tpu.memory_space<semaphore_mem>>)
      %c5_i32_79 = arith.constant 5 : i32
      %115 = arith.addi %74, %c5_i32_79 : i32
      %116 = arith.index_cast %115 : i32 to index
      %117 = memref.load %arg2[%116] : memref<16xi32, #tpu.memory_space<smem>>
      %c5_i32_80 = arith.constant 5 : i32
      %c0_i32_81 = arith.constant 0 : i32
      %118 = tpu.memref_slice %arg3[%117, %c0_i32_81] : memref<128x128xf32, #tpu.memory_space<any>> -> memref<1x128xf32, #tpu.memory_space<any>>
      %c5_i32_82 = arith.constant 5 : i32
      %c0_i32_83 = arith.constant 0 : i32
      %119 = tpu.memref_slice %arg5[%11, %c5_i32_82, %c0_i32_83] : memref<2x8x128xf32, #tpu.memory_space<vmem>> -> memref<1x1x128xf32, #tpu.memory_space<vmem>>
      %120 = tpu.memref_squeeze %119 : memref<1x1x128xf32, #tpu.memory_space<vmem>> -> memref<1x128xf32, #tpu.memory_space<vmem>>
      %121 = tpu.memref_slice %arg6[%11, %c5_i32_80] : memref<2x8x!tpu.dma_semaphore, #tpu.memory_space<semaphore_mem>> -> memref<1x1x!tpu.dma_semaphore, #tpu.memory_space<semaphore_mem>>
      %122 = tpu.memref_squeeze %121 : memref<1x1x!tpu.dma_semaphore, #tpu.memory_space<semaphore_mem>> -> memref<!tpu.dma_semaphore, #tpu.memory_space<semaphore_mem>>
      tpu.enqueue_dma source(%118 : memref<1x128xf32, #tpu.memory_space<any>>) target(%120 : memref<1x128xf32, #tpu.memory_space<vmem>>) target_semaphore(%122 : memref<!tpu.dma_semaphore, #tpu.memory_space<semaphore_mem>>)
      %c6_i32_84 = arith.constant 6 : i32
      %123 = arith.addi %74, %c6_i32_84 : i32
      %124 = arith.index_cast %123 : i32 to index
      %125 = memref.load %arg2[%124] : memref<16xi32, #tpu.memory_space<smem>>
      %c6_i32_85 = arith.constant 6 : i32
      %c0_i32_86 = arith.constant 0 : i32
      %126 = tpu.memref_slice %arg3[%125, %c0_i32_86] : memref<128x128xf32, #tpu.memory_space<any>> -> memref<1x128xf32, #tpu.memory_space<any>>
      %c6_i32_87 = arith.constant 6 : i32
      %c0_i32_88 = arith.constant 0 : i32
      %127 = tpu.memref_slice %arg5[%11, %c6_i32_87, %c0_i32_88] : memref<2x8x128xf32, #tpu.memory_space<vmem>> -> memref<1x1x128xf32, #tpu.memory_space<vmem>>
      %128 = tpu.memref_squeeze %127 : memref<1x1x128xf32, #tpu.memory_space<vmem>> -> memref<1x128xf32, #tpu.memory_space<vmem>>
      %129 = tpu.memref_slice %arg6[%11, %c6_i32_85] : memref<2x8x!tpu.dma_semaphore, #tpu.memory_space<semaphore_mem>> -> memref<1x1x!tpu.dma_semaphore, #tpu.memory_space<semaphore_mem>>
      %130 = tpu.memref_squeeze %129 : memref<1x1x!tpu.dma_semaphore, #tpu.memory_space<semaphore_mem>> -> memref<!tpu.dma_semaphore, #tpu.memory_space<semaphore_mem>>
      tpu.enqueue_dma source(%126 : memref<1x128xf32, #tpu.memory_space<any>>) target(%128 : memref<1x128xf32, #tpu.memory_space<vmem>>) target_semaphore(%130 : memref<!tpu.dma_semaphore, #tpu.memory_space<semaphore_mem>>)
      %c7_i32_89 = arith.constant 7 : i32
      %131 = arith.addi %74, %c7_i32_89 : i32
      %132 = arith.index_cast %131 : i32 to index
      %133 = memref.load %arg2[%132] : memref<16xi32, #tpu.memory_space<smem>>
      %c7_i32_90 = arith.constant 7 : i32
      %c0_i32_91 = arith.constant 0 : i32
      %134 = tpu.memref_slice %arg3[%133, %c0_i32_91] : memref<128x128xf32, #tpu.memory_space<any>> -> memref<1x128xf32, #tpu.memory_space<any>>
      %c7_i32_92 = arith.constant 7 : i32
      %c0_i32_93 = arith.constant 0 : i32
      %135 = tpu.memref_slice %arg5[%11, %c7_i32_92, %c0_i32_93] : memref<2x8x128xf32, #tpu.memory_space<vmem>> -> memref<1x1x128xf32, #tpu.memory_space<vmem>>
      %136 = tpu.memref_squeeze %135 : memref<1x1x128xf32, #tpu.memory_space<vmem>> -> memref<1x128xf32, #tpu.memory_space<vmem>>
      %137 = tpu.memref_slice %arg6[%11, %c7_i32_90] : memref<2x8x!tpu.dma_semaphore, #tpu.memory_space<semaphore_mem>> -> memref<1x1x!tpu.dma_semaphore, #tpu.memory_space<semaphore_mem>>
      %138 = tpu.memref_squeeze %137 : memref<1x1x!tpu.dma_semaphore, #tpu.memory_space<semaphore_mem>> -> memref<!tpu.dma_semaphore, #tpu.memory_space<semaphore_mem>>
      tpu.enqueue_dma source(%134 : memref<1x128xf32, #tpu.memory_space<any>>) target(%136 : memref<1x128xf32, #tpu.memory_space<vmem>>) target_semaphore(%138 : memref<!tpu.dma_semaphore, #tpu.memory_space<semaphore_mem>>)
    } else {
    }
    %c1_i32_13 = arith.constant 1 : i32
    %26 = arith.addi %arg1, %c1_i32_13 : i32
    %c2_i32_14 = arith.constant 2 : i32
    %27 = arith.cmpi slt, %26, %c2_i32_14 : i32
    %28 = arith.extui %27 : i1 to i32
    %c0_i32_15 = arith.constant 0 : i32
    %29 = arith.cmpi ne, %28, %c0_i32_15 : i32
    scf.if %29 {
      %c1_i32_54 = arith.constant 1 : i32
      %74 = arith.addi %1, %c1_i32_54 : i32
      %c8_i32 = arith.constant 8 : i32
      %75 = arith.muli %74, %c8_i32 : i32
      %c0_i32_55 = arith.constant 0 : i32
      %76 = arith.addi %75, %c0_i32_55 : i32
      %77 = arith.index_cast %76 : i32 to index
      %78 = memref.load %arg2[%77] : memref<16xi32, #tpu.memory_space<smem>>
      %c0_i32_56 = arith.constant 0 : i32
      %c0_i32_57 = arith.constant 0 : i32
      %79 = tpu.memref_slice %arg3[%78, %c0_i32_57] : memref<128x128xf32, #tpu.memory_space<any>> -> memref<1x128xf32, #tpu.memory_space<any>>
      %c0_i32_58 = arith.constant 0 : i32
      %c0_i32_59 = arith.constant 0 : i32
      %80 = tpu.memref_slice %arg5[%22, %c0_i32_58, %c0_i32_59] : memref<2x8x128xf32, #tpu.memory_space<vmem>> -> memref<1x1x128xf32, #tpu.memory_space<vmem>>
      %81 = tpu.memref_squeeze %80 : memref<1x1x128xf32, #tpu.memory_space<vmem>> -> memref<1x128xf32, #tpu.memory_space<vmem>>
      %82 = tpu.memref_slice %arg6[%22, %c0_i32_56] : memref<2x8x!tpu.dma_semaphore, #tpu.memory_space<semaphore_mem>> -> memref<1x1x!tpu.dma_semaphore, #tpu.memory_space<semaphore_mem>>
      %83 = tpu.memref_squeeze %82 : memref<1x1x!tpu.dma_semaphore, #tpu.memory_space<semaphore_mem>> -> memref<!tpu.dma_semaphore, #tpu.memory_space<semaphore_mem>>
      tpu.enqueue_dma source(%79 : memref<1x128xf32, #tpu.memory_space<any>>) target(%81 : memref<1x128xf32, #tpu.memory_space<vmem>>) target_semaphore(%83 : memref<!tpu.dma_semaphore, #tpu.memory_space<semaphore_mem>>)
      %c1_i32_60 = arith.constant 1 : i32
      %84 = arith.addi %75, %c1_i32_60 : i32
      %85 = arith.index_cast %84 : i32 to index
      %86 = memref.load %arg2[%85] : memref<16xi32, #tpu.memory_space<smem>>
      %c1_i32_61 = arith.constant 1 : i32
      %c0_i32_62 = arith.constant 0 : i32
      %87 = tpu.memref_slice %arg3[%86, %c0_i32_62] : memref<128x128xf32, #tpu.memory_space<any>> -> memref<1x128xf32, #tpu.memory_space<any>>
      %c1_i32_63 = arith.constant 1 : i32
      %c0_i32_64 = arith.constant 0 : i32
      %88 = tpu.memref_slice %arg5[%22, %c1_i32_63, %c0_i32_64] : memref<2x8x128xf32, #tpu.memory_space<vmem>> -> memref<1x1x128xf32, #tpu.memory_space<vmem>>
      %89 = tpu.memref_squeeze %88 : memref<1x1x128xf32, #tpu.memory_space<vmem>> -> memref<1x128xf32, #tpu.memory_space<vmem>>
      %90 = tpu.memref_slice %arg6[%22, %c1_i32_61] : memref<2x8x!tpu.dma_semaphore, #tpu.memory_space<semaphore_mem>> -> memref<1x1x!tpu.dma_semaphore, #tpu.memory_space<semaphore_mem>>
      %91 = tpu.memref_squeeze %90 : memref<1x1x!tpu.dma_semaphore, #tpu.memory_space<semaphore_mem>> -> memref<!tpu.dma_semaphore, #tpu.memory_space<semaphore_mem>>
      tpu.enqueue_dma source(%87 : memref<1x128xf32, #tpu.memory_space<any>>) target(%89 : memref<1x128xf32, #tpu.memory_space<vmem>>) target_semaphore(%91 : memref<!tpu.dma_semaphore, #tpu.memory_space<semaphore_mem>>)
      %c2_i32_65 = arith.constant 2 : i32
      %92 = arith.addi %75, %c2_i32_65 : i32
      %93 = arith.index_cast %92 : i32 to index
      %94 = memref.load %arg2[%93] : memref<16xi32, #tpu.memory_space<smem>>
      %c2_i32_66 = arith.constant 2 : i32
      %c0_i32_67 = arith.constant 0 : i32
      %95 = tpu.memref_slice %arg3[%94, %c0_i32_67] : memref<128x128xf32, #tpu.memory_space<any>> -> memref<1x128xf32, #tpu.memory_space<any>>
      %c2_i32_68 = arith.constant 2 : i32
      %c0_i32_69 = arith.constant 0 : i32
      %96 = tpu.memref_slice %arg5[%22, %c2_i32_68, %c0_i32_69] : memref<2x8x128xf32, #tpu.memory_space<vmem>> -> memref<1x1x128xf32, #tpu.memory_space<vmem>>
      %97 = tpu.memref_squeeze %96 : memref<1x1x128xf32, #tpu.memory_space<vmem>> -> memref<1x128xf32, #tpu.memory_space<vmem>>
      %98 = tpu.memref_slice %arg6[%22, %c2_i32_66] : memref<2x8x!tpu.dma_semaphore, #tpu.memory_space<semaphore_mem>> -> memref<1x1x!tpu.dma_semaphore, #tpu.memory_space<semaphore_mem>>
      %99 = tpu.memref_squeeze %98 : memref<1x1x!tpu.dma_semaphore, #tpu.memory_space<semaphore_mem>> -> memref<!tpu.dma_semaphore, #tpu.memory_space<semaphore_mem>>
      tpu.enqueue_dma source(%95 : memref<1x128xf32, #tpu.memory_space<any>>) target(%97 : memref<1x128xf32, #tpu.memory_space<vmem>>) target_semaphore(%99 : memref<!tpu.dma_semaphore, #tpu.memory_space<semaphore_mem>>)
      %c3_i32_70 = arith.constant 3 : i32
      %100 = arith.addi %75, %c3_i32_70 : i32
      %101 = arith.index_cast %100 : i32 to index
      %102 = memref.load %arg2[%101] : memref<16xi32, #tpu.memory_space<smem>>
      %c3_i32_71 = arith.constant 3 : i32
      %c0_i32_72 = arith.constant 0 : i32
      %103 = tpu.memref_slice %arg3[%102, %c0_i32_72] : memref<128x128xf32, #tpu.memory_space<any>> -> memref<1x128xf32, #tpu.memory_space<any>>
      %c3_i32_73 = arith.constant 3 : i32
      %c0_i32_74 = arith.constant 0 : i32
      %104 = tpu.memref_slice %arg5[%22, %c3_i32_73, %c0_i32_74] : memref<2x8x128xf32, #tpu.memory_space<vmem>> -> memref<1x1x128xf32, #tpu.memory_space<vmem>>
      %105 = tpu.memref_squeeze %104 : memref<1x1x128xf32, #tpu.memory_space<vmem>> -> memref<1x128xf32, #tpu.memory_space<vmem>>
      %106 = tpu.memref_slice %arg6[%22, %c3_i32_71] : memref<2x8x!tpu.dma_semaphore, #tpu.memory_space<semaphore_mem>> -> memref<1x1x!tpu.dma_semaphore, #tpu.memory_space<semaphore_mem>>
      %107 = tpu.memref_squeeze %106 : memref<1x1x!tpu.dma_semaphore, #tpu.memory_space<semaphore_mem>> -> memref<!tpu.dma_semaphore, #tpu.memory_space<semaphore_mem>>
      tpu.enqueue_dma source(%103 : memref<1x128xf32, #tpu.memory_space<any>>) target(%105 : memref<1x128xf32, #tpu.memory_space<vmem>>) target_semaphore(%107 : memref<!tpu.dma_semaphore, #tpu.memory_space<semaphore_mem>>)
      %c4_i32_75 = arith.constant 4 : i32
      %108 = arith.addi %75, %c4_i32_75 : i32
      %109 = arith.index_cast %108 : i32 to index
      %110 = memref.load %arg2[%109] : memref<16xi32, #tpu.memory_space<smem>>
      %c4_i32_76 = arith.constant 4 : i32
      %c0_i32_77 = arith.constant 0 : i32
      %111 = tpu.memref_slice %arg3[%110, %c0_i32_77] : memref<128x128xf32, #tpu.memory_space<any>> -> memref<1x128xf32, #tpu.memory_space<any>>
      %c4_i32_78 = arith.constant 4 : i32
      %c0_i32_79 = arith.constant 0 : i32
      %112 = tpu.memref_slice %arg5[%22, %c4_i32_78, %c0_i32_79] : memref<2x8x128xf32, #tpu.memory_space<vmem>> -> memref<1x1x128xf32, #tpu.memory_space<vmem>>
      %113 = tpu.memref_squeeze %112 : memref<1x1x128xf32, #tpu.memory_space<vmem>> -> memref<1x128xf32, #tpu.memory_space<vmem>>
      %114 = tpu.memref_slice %arg6[%22, %c4_i32_76] : memref<2x8x!tpu.dma_semaphore, #tpu.memory_space<semaphore_mem>> -> memref<1x1x!tpu.dma_semaphore, #tpu.memory_space<semaphore_mem>>
      %115 = tpu.memref_squeeze %114 : memref<1x1x!tpu.dma_semaphore, #tpu.memory_space<semaphore_mem>> -> memref<!tpu.dma_semaphore, #tpu.memory_space<semaphore_mem>>
      tpu.enqueue_dma source(%111 : memref<1x128xf32, #tpu.memory_space<any>>) target(%113 : memref<1x128xf32, #tpu.memory_space<vmem>>) target_semaphore(%115 : memref<!tpu.dma_semaphore, #tpu.memory_space<semaphore_mem>>)
      %c5_i32_80 = arith.constant 5 : i32
      %116 = arith.addi %75, %c5_i32_80 : i32
      %117 = arith.index_cast %116 : i32 to index
      %118 = memref.load %arg2[%117] : memref<16xi32, #tpu.memory_space<smem>>
      %c5_i32_81 = arith.constant 5 : i32
      %c0_i32_82 = arith.constant 0 : i32
      %119 = tpu.memref_slice %arg3[%118, %c0_i32_82] : memref<128x128xf32, #tpu.memory_space<any>> -> memref<1x128xf32, #tpu.memory_space<any>>
      %c5_i32_83 = arith.constant 5 : i32
      %c0_i32_84 = arith.constant 0 : i32
      %120 = tpu.memref_slice %arg5[%22, %c5_i32_83, %c0_i32_84] : memref<2x8x128xf32, #tpu.memory_space<vmem>> -> memref<1x1x128xf32, #tpu.memory_space<vmem>>
      %121 = tpu.memref_squeeze %120 : memref<1x1x128xf32, #tpu.memory_space<vmem>> -> memref<1x128xf32, #tpu.memory_space<vmem>>
      %122 = tpu.memref_slice %arg6[%22, %c5_i32_81] : memref<2x8x!tpu.dma_semaphore, #tpu.memory_space<semaphore_mem>> -> memref<1x1x!tpu.dma_semaphore, #tpu.memory_space<semaphore_mem>>
      %123 = tpu.memref_squeeze %122 : memref<1x1x!tpu.dma_semaphore, #tpu.memory_space<semaphore_mem>> -> memref<!tpu.dma_semaphore, #tpu.memory_space<semaphore_mem>>
      tpu.enqueue_dma source(%119 : memref<1x128xf32, #tpu.memory_space<any>>) target(%121 : memref<1x128xf32, #tpu.memory_space<vmem>>) target_semaphore(%123 : memref<!tpu.dma_semaphore, #tpu.memory_space<semaphore_mem>>)
      %c6_i32_85 = arith.constant 6 : i32
      %124 = arith.addi %75, %c6_i32_85 : i32
      %125 = arith.index_cast %124 : i32 to index
      %126 = memref.load %arg2[%125] : memref<16xi32, #tpu.memory_space<smem>>
      %c6_i32_86 = arith.constant 6 : i32
      %c0_i32_87 = arith.constant 0 : i32
      %127 = tpu.memref_slice %arg3[%126, %c0_i32_87] : memref<128x128xf32, #tpu.memory_space<any>> -> memref<1x128xf32, #tpu.memory_space<any>>
      %c6_i32_88 = arith.constant 6 : i32
      %c0_i32_89 = arith.constant 0 : i32
      %128 = tpu.memref_slice %arg5[%22, %c6_i32_88, %c0_i32_89] : memref<2x8x128xf32, #tpu.memory_space<vmem>> -> memref<1x1x128xf32, #tpu.memory_space<vmem>>
      %129 = tpu.memref_squeeze %128 : memref<1x1x128xf32, #tpu.memory_space<vmem>> -> memref<1x128xf32, #tpu.memory_space<vmem>>
      %130 = tpu.memref_slice %arg6[%22, %c6_i32_86] : memref<2x8x!tpu.dma_semaphore, #tpu.memory_space<semaphore_mem>> -> memref<1x1x!tpu.dma_semaphore, #tpu.memory_space<semaphore_mem>>
      %131 = tpu.memref_squeeze %130 : memref<1x1x!tpu.dma_semaphore, #tpu.memory_space<semaphore_mem>> -> memref<!tpu.dma_semaphore, #tpu.memory_space<semaphore_mem>>
      tpu.enqueue_dma source(%127 : memref<1x128xf32, #tpu.memory_space<any>>) target(%129 : memref<1x128xf32, #tpu.memory_space<vmem>>) target_semaphore(%131 : memref<!tpu.dma_semaphore, #tpu.memory_space<semaphore_mem>>)
      %c7_i32_90 = arith.constant 7 : i32
      %132 = arith.addi %75, %c7_i32_90 : i32
      %133 = arith.index_cast %132 : i32 to index
      %134 = memref.load %arg2[%133] : memref<16xi32, #tpu.memory_space<smem>>
      %c7_i32_91 = arith.constant 7 : i32
      %c0_i32_92 = arith.constant 0 : i32
      %135 = tpu.memref_slice %arg3[%134, %c0_i32_92] : memref<128x128xf32, #tpu.memory_space<any>> -> memref<1x128xf32, #tpu.memory_space<any>>
      %c7_i32_93 = arith.constant 7 : i32
      %c0_i32_94 = arith.constant 0 : i32
      %136 = tpu.memref_slice %arg5[%22, %c7_i32_93, %c0_i32_94] : memref<2x8x128xf32, #tpu.memory_space<vmem>> -> memref<1x1x128xf32, #tpu.memory_space<vmem>>
      %137 = tpu.memref_squeeze %136 : memref<1x1x128xf32, #tpu.memory_space<vmem>> -> memref<1x128xf32, #tpu.memory_space<vmem>>
      %138 = tpu.memref_slice %arg6[%22, %c7_i32_91] : memref<2x8x!tpu.dma_semaphore, #tpu.memory_space<semaphore_mem>> -> memref<1x1x!tpu.dma_semaphore, #tpu.memory_space<semaphore_mem>>
      %139 = tpu.memref_squeeze %138 : memref<1x1x!tpu.dma_semaphore, #tpu.memory_space<semaphore_mem>> -> memref<!tpu.dma_semaphore, #tpu.memory_space<semaphore_mem>>
      tpu.enqueue_dma source(%135 : memref<1x128xf32, #tpu.memory_space<any>>) target(%137 : memref<1x128xf32, #tpu.memory_space<vmem>>) target_semaphore(%139 : memref<!tpu.dma_semaphore, #tpu.memory_space<semaphore_mem>>)
    } else {
    }
    %c0_i32_16 = arith.constant 0 : i32
    %c0_i32_17 = arith.constant 0 : i32
    %c0_i32_18 = arith.constant 0 : i32
    %30 = tpu.memref_slice %arg3[%c0_i32_17, %c0_i32_18] : memref<128x128xf32, #tpu.memory_space<any>> -> memref<1x128xf32, #tpu.memory_space<any>>
    %c0_i32_19 = arith.constant 0 : i32
    %c0_i32_20 = arith.constant 0 : i32
    %31 = tpu.memref_slice %arg5[%11, %c0_i32_19, %c0_i32_20] : memref<2x8x128xf32, #tpu.memory_space<vmem>> -> memref<1x1x128xf32, #tpu.memory_space<vmem>>
    %32 = tpu.memref_squeeze %31 : memref<1x1x128xf32, #tpu.memory_space<vmem>> -> memref<1x128xf32, #tpu.memory_space<vmem>>
    %33 = tpu.memref_slice %arg6[%11, %c0_i32_16] : memref<2x8x!tpu.dma_semaphore, #tpu.memory_space<semaphore_mem>> -> memref<1x1x!tpu.dma_semaphore, #tpu.memory_space<semaphore_mem>>
    %34 = tpu.memref_squeeze %33 : memref<1x1x!tpu.dma_semaphore, #tpu.memory_space<semaphore_mem>> -> memref<!tpu.dma_semaphore, #tpu.memory_space<semaphore_mem>>
    tpu.wait_dma2 semaphore(%34 : memref<!tpu.dma_semaphore, #tpu.memory_space<semaphore_mem>>) src(%30 : memref<1x128xf32, #tpu.memory_space<any>>) dst(%32 : memref<1x128xf32, #tpu.memory_space<vmem>>)
    %c1_i32_21 = arith.constant 1 : i32
    %c0_i32_22 = arith.constant 0 : i32
    %c0_i32_23 = arith.constant 0 : i32
    %35 = tpu.memref_slice %arg3[%c0_i32_22, %c0_i32_23] : memref<128x128xf32, #tpu.memory_space<any>> -> memref<1x128xf32, #tpu.memory_space<any>>
    %c1_i32_24 = arith.constant 1 : i32
    %c0_i32_25 = arith.constant 0 : i32
    %36 = tpu.memref_slice %arg5[%11, %c1_i32_24, %c0_i32_25] : memref<2x8x128xf32, #tpu.memory_space<vmem>> -> memref<1x1x128xf32, #tpu.memory_space<vmem>>
    %37 = tpu.memref_squeeze %36 : memref<1x1x128xf32, #tpu.memory_space<vmem>> -> memref<1x128xf32, #tpu.memory_space<vmem>>
    %38 = tpu.memref_slice %arg6[%11, %c1_i32_21] : memref<2x8x!tpu.dma_semaphore, #tpu.memory_space<semaphore_mem>> -> memref<1x1x!tpu.dma_semaphore, #tpu.memory_space<semaphore_mem>>
    %39 = tpu.memref_squeeze %38 : memref<1x1x!tpu.dma_semaphore, #tpu.memory_space<semaphore_mem>> -> memref<!tpu.dma_semaphore, #tpu.memory_space<semaphore_mem>>
    tpu.wait_dma2 semaphore(%39 : memref<!tpu.dma_semaphore, #tpu.memory_space<semaphore_mem>>) src(%35 : memref<1x128xf32, #tpu.memory_space<any>>) dst(%37 : memref<1x128xf32, #tpu.memory_space<vmem>>)
    %c2_i32_26 = arith.constant 2 : i32
    %c0_i32_27 = arith.constant 0 : i32
    %c0_i32_28 = arith.constant 0 : i32
    %40 = tpu.memref_slice %arg3[%c0_i32_27, %c0_i32_28] : memref<128x128xf32, #tpu.memory_space<any>> -> memref<1x128xf32, #tpu.memory_space<any>>
    %c2_i32_29 = arith.constant 2 : i32
    %c0_i32_30 = arith.constant 0 : i32
    %41 = tpu.memref_slice %arg5[%11, %c2_i32_29, %c0_i32_30] : memref<2x8x128xf32, #tpu.memory_space<vmem>> -> memref<1x1x128xf32, #tpu.memory_space<vmem>>
    %42 = tpu.memref_squeeze %41 : memref<1x1x128xf32, #tpu.memory_space<vmem>> -> memref<1x128xf32, #tpu.memory_space<vmem>>
    %43 = tpu.memref_slice %arg6[%11, %c2_i32_26] : memref<2x8x!tpu.dma_semaphore, #tpu.memory_space<semaphore_mem>> -> memref<1x1x!tpu.dma_semaphore, #tpu.memory_space<semaphore_mem>>
    %44 = tpu.memref_squeeze %43 : memref<1x1x!tpu.dma_semaphore, #tpu.memory_space<semaphore_mem>> -> memref<!tpu.dma_semaphore, #tpu.memory_space<semaphore_mem>>
    tpu.wait_dma2 semaphore(%44 : memref<!tpu.dma_semaphore, #tpu.memory_space<semaphore_mem>>) src(%40 : memref<1x128xf32, #tpu.memory_space<any>>) dst(%42 : memref<1x128xf32, #tpu.memory_space<vmem>>)
    %c3_i32 = arith.constant 3 : i32
    %c0_i32_31 = arith.constant 0 : i32
    %c0_i32_32 = arith.constant 0 : i32
    %45 = tpu.memref_slice %arg3[%c0_i32_31, %c0_i32_32] : memref<128x128xf32, #tpu.memory_space<any>> -> memref<1x128xf32, #tpu.memory_space<any>>
    %c3_i32_33 = arith.constant 3 : i32
    %c0_i32_34 = arith.constant 0 : i32
    %46 = tpu.memref_slice %arg5[%11, %c3_i32_33, %c0_i32_34] : memref<2x8x128xf32, #tpu.memory_space<vmem>> -> memref<1x1x128xf32, #tpu.memory_space<vmem>>
    %47 = tpu.memref_squeeze %46 : memref<1x1x128xf32, #tpu.memory_space<vmem>> -> memref<1x128xf32, #tpu.memory_space<vmem>>
    %48 = tpu.memref_slice %arg6[%11, %c3_i32] : memref<2x8x!tpu.dma_semaphore, #tpu.memory_space<semaphore_mem>> -> memref<1x1x!tpu.dma_semaphore, #tpu.memory_space<semaphore_mem>>
    %49 = tpu.memref_squeeze %48 : memref<1x1x!tpu.dma_semaphore, #tpu.memory_space<semaphore_mem>> -> memref<!tpu.dma_semaphore, #tpu.memory_space<semaphore_mem>>
    tpu.wait_dma2 semaphore(%49 : memref<!tpu.dma_semaphore, #tpu.memory_space<semaphore_mem>>) src(%45 : memref<1x128xf32, #tpu.memory_space<any>>) dst(%47 : memref<1x128xf32, #tpu.memory_space<vmem>>)
    %c4_i32 = arith.constant 4 : i32
    %c0_i32_35 = arith.constant 0 : i32
    %c0_i32_36 = arith.constant 0 : i32
    %50 = tpu.memref_slice %arg3[%c0_i32_35, %c0_i32_36] : memref<128x128xf32, #tpu.memory_space<any>> -> memref<1x128xf32, #tpu.memory_space<any>>
    %c4_i32_37 = arith.constant 4 : i32
    %c0_i32_38 = arith.constant 0 : i32
    %51 = tpu.memref_slice %arg5[%11, %c4_i32_37, %c0_i32_38] : memref<2x8x128xf32, #tpu.memory_space<vmem>> -> memref<1x1x128xf32, #tpu.memory_space<vmem>>
    %52 = tpu.memref_squeeze %51 : memref<1x1x128xf32, #tpu.memory_space<vmem>> -> memref<1x128xf32, #tpu.memory_space<vmem>>
    %53 = tpu.memref_slice %arg6[%11, %c4_i32] : memref<2x8x!tpu.dma_semaphore, #tpu.memory_space<semaphore_mem>> -> memref<1x1x!tpu.dma_semaphore, #tpu.memory_space<semaphore_mem>>
    %54 = tpu.memref_squeeze %53 : memref<1x1x!tpu.dma_semaphore, #tpu.memory_space<semaphore_mem>> -> memref<!tpu.dma_semaphore, #tpu.memory_space<semaphore_mem>>
    tpu.wait_dma2 semaphore(%54 : memref<!tpu.dma_semaphore, #tpu.memory_space<semaphore_mem>>) src(%50 : memref<1x128xf32, #tpu.memory_space<any>>) dst(%52 : memref<1x128xf32, #tpu.memory_space<vmem>>)
    %c5_i32 = arith.constant 5 : i32
    %c0_i32_39 = arith.constant 0 : i32
    %c0_i32_40 = arith.constant 0 : i32
    %55 = tpu.memref_slice %arg3[%c0_i32_39, %c0_i32_40] : memref<128x128xf32, #tpu.memory_space<any>> -> memref<1x128xf32, #tpu.memory_space<any>>
    %c5_i32_41 = arith.constant 5 : i32
    %c0_i32_42 = arith.constant 0 : i32
    %56 = tpu.memref_slice %arg5[%11, %c5_i32_41, %c0_i32_42] : memref<2x8x128xf32, #tpu.memory_space<vmem>> -> memref<1x1x128xf32, #tpu.memory_space<vmem>>
    %57 = tpu.memref_squeeze %56 : memref<1x1x128xf32, #tpu.memory_space<vmem>> -> memref<1x128xf32, #tpu.memory_space<vmem>>
    %58 = tpu.memref_slice %arg6[%11, %c5_i32] : memref<2x8x!tpu.dma_semaphore, #tpu.memory_space<semaphore_mem>> -> memref<1x1x!tpu.dma_semaphore, #tpu.memory_space<semaphore_mem>>
    %59 = tpu.memref_squeeze %58 : memref<1x1x!tpu.dma_semaphore, #tpu.memory_space<semaphore_mem>> -> memref<!tpu.dma_semaphore, #tpu.memory_space<semaphore_mem>>
    tpu.wait_dma2 semaphore(%59 : memref<!tpu.dma_semaphore, #tpu.memory_space<semaphore_mem>>) src(%55 : memref<1x128xf32, #tpu.memory_space<any>>) dst(%57 : memref<1x128xf32, #tpu.memory_space<vmem>>)
    %c6_i32 = arith.constant 6 : i32
    %c0_i32_43 = arith.constant 0 : i32
    %c0_i32_44 = arith.constant 0 : i32
    %60 = tpu.memref_slice %arg3[%c0_i32_43, %c0_i32_44] : memref<128x128xf32, #tpu.memory_space<any>> -> memref<1x128xf32, #tpu.memory_space<any>>
    %c6_i32_45 = arith.constant 6 : i32
    %c0_i32_46 = arith.constant 0 : i32
    %61 = tpu.memref_slice %arg5[%11, %c6_i32_45, %c0_i32_46] : memref<2x8x128xf32, #tpu.memory_space<vmem>> -> memref<1x1x128xf32, #tpu.memory_space<vmem>>
    %62 = tpu.memref_squeeze %61 : memref<1x1x128xf32, #tpu.memory_space<vmem>> -> memref<1x128xf32, #tpu.memory_space<vmem>>
    %63 = tpu.memref_slice %arg6[%11, %c6_i32] : memref<2x8x!tpu.dma_semaphore, #tpu.memory_space<semaphore_mem>> -> memref<1x1x!tpu.dma_semaphore, #tpu.memory_space<semaphore_mem>>
    %64 = tpu.memref_squeeze %63 : memref<1x1x!tpu.dma_semaphore, #tpu.memory_space<semaphore_mem>> -> memref<!tpu.dma_semaphore, #tpu.memory_space<semaphore_mem>>
    tpu.wait_dma2 semaphore(%64 : memref<!tpu.dma_semaphore, #tpu.memory_space<semaphore_mem>>) src(%60 : memref<1x128xf32, #tpu.memory_space<any>>) dst(%62 : memref<1x128xf32, #tpu.memory_space<vmem>>)
    %c7_i32 = arith.constant 7 : i32
    %c0_i32_47 = arith.constant 0 : i32
    %c0_i32_48 = arith.constant 0 : i32
    %65 = tpu.memref_slice %arg3[%c0_i32_47, %c0_i32_48] : memref<128x128xf32, #tpu.memory_space<any>> -> memref<1x128xf32, #tpu.memory_space<any>>
    %c7_i32_49 = arith.constant 7 : i32
    %c0_i32_50 = arith.constant 0 : i32
    %66 = tpu.memref_slice %arg5[%11, %c7_i32_49, %c0_i32_50] : memref<2x8x128xf32, #tpu.memory_space<vmem>> -> memref<1x1x128xf32, #tpu.memory_space<vmem>>
    %67 = tpu.memref_squeeze %66 : memref<1x1x128xf32, #tpu.memory_space<vmem>> -> memref<1x128xf32, #tpu.memory_space<vmem>>
    %68 = tpu.memref_slice %arg6[%11, %c7_i32] : memref<2x8x!tpu.dma_semaphore, #tpu.memory_space<semaphore_mem>> -> memref<1x1x!tpu.dma_semaphore, #tpu.memory_space<semaphore_mem>>
    %69 = tpu.memref_squeeze %68 : memref<1x1x!tpu.dma_semaphore, #tpu.memory_space<semaphore_mem>> -> memref<!tpu.dma_semaphore, #tpu.memory_space<semaphore_mem>>
    tpu.wait_dma2 semaphore(%69 : memref<!tpu.dma_semaphore, #tpu.memory_space<semaphore_mem>>) src(%65 : memref<1x128xf32, #tpu.memory_space<any>>) dst(%67 : memref<1x128xf32, #tpu.memory_space<vmem>>)
    %70 = arith.index_cast %11 : i32 to index
    %c0 = arith.constant 0 : index
    %c0_51 = arith.constant 0 : index
    %71 = vector.load %arg5[%70, %c0, %c0_51] : memref<2x8x128xf32, #tpu.memory_space<vmem>>, vector<1x8x128xf32>
    %72 = vector.shape_cast %71 : vector<1x8x128xf32> to vector<8x128xf32>
    %c0_52 = arith.constant 0 : index
    %c0_53 = arith.constant 0 : index
    %73 = vector.load %arg4[%c0_52, %c0_53] : memref<8x128xf32, #tpu.memory_space<vmem>>, vector<8x128xf32>
    tpu.vector_store %arg4[%c0_52, %c0_53], %72 {strides = array<i32>} : memref<8x128xf32, #tpu.memory_space<vmem>>, vector<8x128xf32>,
    return
  }
  func.func @transform_1(%arg0: i32, %arg1: i32, %arg2: memref<16xi32, #tpu.memory_space<smem>>) -> (i32, i32) {
    %c2_i32 = arith.constant 2 : i32
    %0 = arith.muli %arg0, %c2_i32 : i32
    %1 = arith.addi %0, %arg1 : i32
    %c0_i32 = arith.constant 0 : i32
    %c0_i32_0 = arith.constant 0 : i32
    return %1, %c0_i32 : i32, i32
  }
}

</mosaic_0001>

<llo_original>
// kernel: tpu_custom_call.1
$region0: #{tpu_custom_call.1}
  #allocation0 [shape = 'u32[]', space=smem, size = 0x4, offset = 0x4, fixed_abs, tag = 'smem constant byte address 0x4 - core index']
  #allocation1 [shape = 'u32[144,128]{1,0:T(1,128)}', space=vmem, size = 0x12000, scoped, tag = 'internal scratch']
  #allocation2 [shape = 'f32[2,8,128]{2,1,0:T(8,128)}', space=vmem, size = 0x2000, scoped, tag = 'scratch operand']
  #allocation3 [shape = 's32[16]{0}', space=sflag, size = 0x40, scoped, tag = 'scratch operand']
  #allocation4 [shape = 's32[1]{0}', space=sflag, size = 0x4, scoped, tag = 'scoped memory for tpu_custom_call.1']
  #allocation5 [shape = 'u8[512]{0}', space=smem, size = 0x200, scoped, tag = 'prefetched SMEM operand 0']
  #allocation8 [shape = 's32[]', space=sflag, size = 0x4, offset = 0, fixed_abs, tag = 'sflag constant byte address 0x0 - dummy sync flag']
  #allocation9 [shape = 's32[]', space=sflag, size = 0x4, offset = 0, fixed_abs, tag = 'sflag constant byte address 0x0 - dummy sync flag']
  #allocation10 [shape = 'u32[]', space=smem, size = 0x4, offset = 0x44, fixed_abs, tag = 'smem constant byte address 0x44 - assertion arg 0']
  #allocation11 [shape = 'u32[]', space=smem, size = 0x4, offset = 0x48, fixed_abs, tag = 'smem constant byte address 0x48 - assertion arg 1']
  #allocation12 [shape = 's32[]', space=sflag, size = 0x4, offset = 0, fixed_abs, tag = 'sflag constant byte address 0x0 - dummy sync flag']
  #allocation13 [shape = 's32[]', space=sflag, size = 0x4, offset = 0, fixed_abs, tag = 'sflag constant byte address 0x0 - dummy sync flag']
  #allocation14 [shape = 's32[]', space=sflag, size = 0x4, offset = 0, fixed_abs, tag = 'sflag constant byte address 0x0 - dummy sync flag']
  #allocation15 [shape = 's32[]', space=sflag, size = 0x4, offset = 0, fixed_abs, tag = 'sflag constant byte address 0x0 - dummy sync flag']
  #allocation16 [shape = 's32[]', space=sflag, size = 0x4, offset = 0, fixed_abs, tag = 'sflag constant byte address 0x0 - dummy sync flag']
  #allocation17 [shape = 's32[]', space=sflag, size = 0x4, offset = 0, fixed_abs, tag = 'sflag constant byte address 0x0 - dummy sync flag']
  #allocation18 [shape = 's32[]', space=sflag, size = 0x4, offset = 0, fixed_abs, tag = 'sflag constant byte address 0x0 - dummy sync flag']
  #allocation19 [shape = 's32[]', space=sflag, size = 0x4, offset = 0, fixed_abs, tag = 'sflag constant byte address 0x0 - dummy sync flag']
  #allocation20 [shape = 's32[]', space=sflag, size = 0x4, offset = 0, fixed_abs, tag = 'sflag constant byte address 0x0 - dummy sync flag']
  #allocation21 [shape = 's32[]', space=sflag, size = 0x4, offset = 0, fixed_abs, tag = 'sflag constant byte address 0x0 - dummy sync flag']
  #allocation22 [shape = 's32[]', space=sflag, size = 0x4, offset = 0, fixed_abs, tag = 'sflag constant byte address 0x0 - dummy sync flag']
  #allocation23 [shape = 's32[]', space=sflag, size = 0x4, offset = 0, fixed_abs, tag = 'sflag constant byte address 0x0 - dummy sync flag']
  #allocation24 [shape = 's32[]', space=sflag, size = 0x4, offset = 0, fixed_abs, tag = 'sflag constant byte address 0x0 - dummy sync flag']
  #allocation25 [shape = 's32[]', space=sflag, size = 0x4, offset = 0, fixed_abs, tag = 'sflag constant byte address 0x0 - dummy sync flag']
  #allocation26 [shape = 's32[]', space=sflag, size = 0x4, offset = 0, fixed_abs, tag = 'sflag constant byte address 0x0 - dummy sync flag']
  #allocation27 [shape = 's32[]', space=sflag, size = 0x4, offset = 0, fixed_abs, tag = 'sflag constant byte address 0x0 - dummy sync flag']
  #allocation28 [shape = 's32[]', space=sflag, size = 0x4, offset = 0, fixed_abs, tag = 'sflag constant byte address 0x0 - dummy sync flag']
  #allocation29 [shape = 's32[]', space=sflag, size = 0x4, offset = 0, fixed_abs, tag = 'sflag constant byte address 0x0 - dummy sync flag']
  #allocation30 [shape = 's32[]', space=sflag, size = 0x4, offset = 0, fixed_abs, tag = 'sflag constant byte address 0x0 - dummy sync flag']
  #allocation31 [shape = 's32[]', space=sflag, size = 0x4, offset = 0, fixed_abs, tag = 'sflag constant byte address 0x0 - dummy sync flag']
  #allocation32 [shape = 's32[]', space=sflag, size = 0x4, offset = 0, fixed_abs, tag = 'sflag constant byte address 0x0 - dummy sync flag']
  #allocation33 [shape = 's32[]', space=sflag, size = 0x4, offset = 0, fixed_abs, tag = 'sflag constant byte address 0x0 - dummy sync flag']
  #allocation34 [shape = 's32[]', space=sflag, size = 0x4, offset = 0, fixed_abs, tag = 'sflag constant byte address 0x0 - dummy sync flag']
  #allocation35 [shape = 's32[]', space=sflag, size = 0x4, offset = 0, fixed_abs, tag = 'sflag constant byte address 0x0 - dummy sync flag']
  #allocation36 [shape = 's32[]', space=sflag, size = 0x4, offset = 0, fixed_abs, tag = 'sflag constant byte address 0x0 - dummy sync flag']
  #allocation37 [shape = 's32[]', space=sflag, size = 0x4, offset = 0, fixed_abs, tag = 'sflag constant byte address 0x0 - dummy sync flag']
  #allocation38 [shape = 's32[]', space=sflag, size = 0x4, offset = 0, fixed_abs, tag = 'sflag constant byte address 0x0 - dummy sync flag']
  #allocation39 [shape = 's32[]', space=sflag, size = 0x4, offset = 0, fixed_abs, tag = 'sflag constant byte address 0x0 - dummy sync flag']
  #allocation40 [shape = 's32[]', space=sflag, size = 0x4, offset = 0, fixed_abs, tag = 'sflag constant byte address 0x0 - dummy sync flag']
  #allocation41 [shape = 's32[]', space=sflag, size = 0x4, offset = 0, fixed_abs, tag = 'sflag constant byte address 0x0 - dummy sync flag']
  %s0 = inlined_call_operand.hbm [shape: s32[16], index: 0, kind: input, shape index: {}]
  %s1 = inlined_call_operand.hbm [shape: f32[128,128], index: 1, kind: input, shape index: {}]
  %s2 = inlined_call_operand.hbm [shape: f32[16,128], index: 2, kind: output, shape index: {}]
  %s3 = sld [smem:[#allocation0]]
  $region97: #{tpu_custom_call.1} parent=0
    _
  %s5 = ssub.s32 1, %s3
  %s6 = scalar_select 0, %s5, %s3
  %8 = dma.hbm_to_smem %s0, 16, [#allocation5], [#allocation4]
  %9 = dma.done [#allocation4], 16
  %10 = sfence
  $region1: #{tpu_custom_call.1} parent=0
    #allocation6 [shape = 'u8[8192]{0}', space=vmem, size = 0x2000, scoped, tag = 'output window, operand 0']
    #allocation7 [shape = 's32[2]{0}', space=sflag, size = 0x8, scoped, tag = 'scoped memory for tpu_custom_call.1']
    %11 = vsyncpa [#allocation7], 0
    %s12 = scalar_lea.sflag [#allocation7], 1
    %13 = vsyncpa %s12, 0
    loop: start=0, step=1, limit=3
    $region2: #{tpu_custom_call.1} parent=1 // loop_pre_header
      _
    $region3: #{tpu_custom_call.1} parent=1 // loop_header
      %s15 = sphi 0, %s19
      %p16 = scmp.ge.s32.totalorder %s15, 3
      %s21 = sphi 0, %s31
      %s22 = sphi 0, %s27
      %s23 = sphi 0, %s21
      %s24 = sphi 0, %s22
      %s38 = sphi 0, %s40
      %s41 = sphi 0, %s38
      %s51 = sphi 0, %s41
    $region4: #{tpu_custom_call.1} parent=1 // loop_header_branch
      %18 = sbr.rel (%p16) target = $region8
    $region5: #{tpu_custom_call.1} parent=1 // loop_body
      %s20 = ssub.s32 %s15, 1
      %s25 = sadd.s32 1, %s22
      %p26 = scmp.ge.s32.totalorder %s25, 2
      %s27 = scalar_select %p26, 0, %s25
      %s28 = sadd.s32 1, %s21
      %s29 = scalar_select %p26, %s28, %s21
      %p30 = scmp.ge.s32.totalorder %s29, 1
      %s31 = scalar_select %p30, 0, %s29
      %s32 = smul.u32 %s21, 2
      %s33 = sadd.s32 %s32, %s22
      %s34 = smul.u32 %s31, 2
      %s35 = sadd.s32 %s34, %s27
      %s36 = ssub.s32 %s33, %s35
      %p37 = scmp.eq.s32.totalorder %s36, 0
      %s39 = sadd.s32 %s38, 1
      %s40 = scalar_select %p37, %s38, %s39
      %p42 = pneg %p37
      %p43 = scmp.eq.s32.totalorder %s15, 1
      %p44 = por %p42, %p43
      %p45 = scmp.ne.s32.totalorder %s38, %s41
      %p46 = scmp.eq.s32.totalorder %s15, 0
      %p47 = por %p45, %p46
      %p48 = scmp.ne.s32.totalorder %s38, %s41
      %p49 = scmp.eq.s32.totalorder %s20, 1
      %p50 = por %p48, %p49
      %p52 = scmp.ne.s32.totalorder %s41, %s51
      %p53 = scmp.eq.s32.totalorder %s20, 0
      %p54 = por %p52, %p53
      %p55 = scmp.lt.s32.totalorder %s15, 2
      // Predicated region
      $region9: #{tpu_custom_call.1} parent=5 // pred_check
        %p56 = pneg %p55
      $region10: #{tpu_custom_call.1} parent=5 // pred_check_branch
        %58 = sbr.rel (%p56) target = $region12
      $region11: #{tpu_custom_call.1} parent=5 // pred_region
        %p59 = pneg %p47
        %p60 = pneg %p44
        %s61 = sand.u32 %s38, 1
        %s62 = scalar_lea.sflag [#allocation7], %s61
        %s63 = sand.u32 %s38, 1
        %s64 = smul.addr %s63, 8
        %s65 = scalar_lea.vmem [#allocation6], %s64
        %s66 = smul.u32 %s21, 2
        %s67 = sadd.s32 %s66, %s22
        %s68 = smul.u32 %s21, 2
        %s69 = sadd.s32 %s68, %s22
        %p70 = scmp.lt.s32.totalorder %s22, 0
        %s71 = ssub.s32 0, %s22
        %s72 = scalar_select %p70, %s71, %s22
        %s73 = sand.u32 %s72, 1
        %s74 = ssub.s32 0, %s73
        %s75 = scalar_select %p70, %s74, %s73
        %p76 = scmp.ne.s32.totalorder %s75, 0
        %p77 = scmp.lt.s32.totalorder %s75, 0
        %p78 = pnand %p77, %p76
        %p79 = pneg %p78
        %s80 = sadd.s32 %s75, 2
        %s81 = scalar_select %p79, %s80, %s75
        %s82 = sadd.s32 %s22, 1
        %p83 = scmp.lt.s32.totalorder %s82, 0
        %s84 = ssub.s32 0, %s82
        %s85 = scalar_select %p83, %s84, %s82
        %s86 = sand.u32 %s85, 1
        %s87 = ssub.s32 0, %s86
        %s88 = scalar_select %p83, %s87, %s86
        %p89 = scmp.ne.s32.totalorder %s88, 0
        %p90 = scmp.lt.s32.totalorder %s88, 0
        %p91 = pnand %p90, %p89
        %p92 = pneg %p91
        %s93 = sadd.s32 %s88, 2
        %s94 = scalar_select %p92, %s93, %s88
        %p95 = scmp.eq.s32.totalorder %s22, 0
        // Predicated region
        $region13: #{tpu_custom_call.1} parent=11 // pred_check
          %p96 = pneg %p95
        $region14: #{tpu_custom_call.1} parent=11 // pred_check_branch
          %98 = sbr.rel (%p96) target = $region16
        $region15: #{tpu_custom_call.1} parent=11 // pred_region
          %s99 = smul.u32 %s69, 8
          %s100 = sld [smem:[#allocation5 + %s99]]
          %s101 = smul.addr %s100, 16
          %s102 = scalar_lea.hbm %s1, %s101
          %s103 = smul.u32 %s81, 8
          %s104 = scalar_lea.vmem [#allocation2], %s103
          %s105 = scalar_lea.sflag [#allocation3], %s103
          // Predicated region
          $region17: #{tpu_custom_call.1} parent=15 // pred_check
            _
          $region18: #{tpu_custom_call.1} parent=15 // pred_check_branch
            %107 = sbr.rel target = $region20
          $region19: #{tpu_custom_call.1} parent=15 // pred_region
            %108 = sst [smem:[#allocation10]] [#allocation9]
            %109 = sst [smem:[#allocation11]] [#allocation8]
          $region20: #{tpu_custom_call.1} parent=15 // pred_fallthru
            _
          %111 = shalt.err (0)
          %s113 = sshll.u32 %s104, 4
          %s114 = int_to_ptr.vmem [resolvable:$true] %s113
          %116 = dma.hbm_to_vmem [thread:$0]  %s102, 16, %s114, %s105
          %s117 = sadd.s32 %s99, 1
          %s118 = sld [smem:[#allocation5 + %s117]]
          %s119 = smul.addr %s118, 16
          %s120 = scalar_lea.hbm %s1, %s119
          %s121 = sadd.s32 1, %s103
          %s122 = scalar_lea.vmem [#allocation2], %s121
          %s123 = scalar_lea.sflag [#allocation3], %s121
          // Predicated region
          $region21: #{tpu_custom_call.1} parent=15 // pred_check
            _
          $region22: #{tpu_custom_call.1} parent=15 // pred_check_branch
            %125 = sbr.rel target = $region24
          $region23: #{tpu_custom_call.1} parent=15 // pred_region
            %126 = sst [smem:[#allocation10]] [#allocation13]
            %127 = sst [smem:[#allocation11]] [#allocation12]
          $region24: #{tpu_custom_call.1} parent=15 // pred_fallthru
            _
          %129 = shalt.err (0)
          %s131 = sshll.u32 %s122, 4
          %s132 = int_to_ptr.vmem [resolvable:$true] %s131
          %134 = dma.hbm_to_vmem [thread:$0]  %s120, 16, %s132, %s123
          %s135 = sadd.s32 %s99, 2
          %s136 = sld [smem:[#allocation5 + %s135]]
          %s137 = smul.addr %s136, 16
          %s138 = scalar_lea.hbm %s1, %s137
          %s139 = sadd.s32 2, %s103
          %s140 = scalar_lea.vmem [#allocation2], %s139
          %s141 = scalar_lea.sflag [#allocation3], %s139
          // Predicated region
          $region25: #{tpu_custom_call.1} parent=15 // pred_check
            _
          $region26: #{tpu_custom_call.1} parent=15 // pred_check_branch
            %143 = sbr.rel target = $region28
          $region27: #{tpu_custom_call.1} parent=15 // pred_region
            %144 = sst [smem:[#allocation10]] [#allocation15]
            %145 = sst [smem:[#allocation11]] [#allocation14]
          $region28: #{tpu_custom_call.1} parent=15 // pred_fallthru
            _
          %147 = shalt.err (0)
          %s149 = sshll.u32 %s140, 4
          %s150 = int_to_ptr.vmem [resolvable:$true] %s149
          %152 = dma.hbm_to_vmem [thread:$0]  %s138, 16, %s150, %s141
          %s153 = sadd.s32 %s99, 3
          %s154 = sld [smem:[#allocation5 + %s153]]
          %s155 = smul.addr %s154, 16
          %s156 = scalar_lea.hbm %s1, %s155
          %s157 = sadd.s32 3, %s103
          %s158 = scalar_lea.vmem [#allocation2], %s157
          %s159 = scalar_lea.sflag [#allocation3], %s157
          // Predicated region
          $region29: #{tpu_custom_call.1} parent=15 // pred_check
            _
          $region30: #{tpu_custom_call.1} parent=15 // pred_check_branch
            %161 = sbr.rel target = $region32
          $region31: #{tpu_custom_call.1} parent=15 // pred_region
            %162 = sst [smem:[#allocation10]] [#allocation17]
            %163 = sst [smem:[#allocation11]] [#allocation16]
          $region32: #{tpu_custom_call.1} parent=15 // pred_fallthru
            _
          %165 = shalt.err (0)
          %s167 = sshll.u32 %s158, 4
          %s168 = int_to_ptr.vmem [resolvable:$true] %s167
          %170 = dma.hbm_to_vmem [thread:$0]  %s156, 16, %s168, %s159
          %s171 = sadd.s32 %s99, 4
          %s172 = sld [smem:[#allocation5 + %s171]]
          %s173 = smul.addr %s172, 16
          %s174 = scalar_lea.hbm %s1, %s173
          %s175 = sadd.s32 4, %s103
          %s176 = scalar_lea.vmem [#allocation2], %s175
          %s177 = scalar_lea.sflag [#allocation3], %s175
          // Predicated region
          $region33: #{tpu_custom_call.1} parent=15 // pred_check
            _
          $region34: #{tpu_custom_call.1} parent=15 // pred_check_branch
            %179 = sbr.rel target = $region36
          $region35: #{tpu_custom_call.1} parent=15 // pred_region
            %180 = sst [smem:[#allocation10]] [#allocation19]
            %181 = sst [smem:[#allocation11]] [#allocation18]
          $region36: #{tpu_custom_call.1} parent=15 // pred_fallthru
            _
          %183 = shalt.err (0)
          %s185 = sshll.u32 %s176, 4
          %s186 = int_to_ptr.vmem [resolvable:$true] %s185
          %188 = dma.hbm_to_vmem [thread:$0]  %s174, 16, %s186, %s177
          %s189 = sadd.s32 %s99, 5
          %s190 = sld [smem:[#allocation5 + %s189]]
          %s191 = smul.addr %s190, 16
          %s192 = scalar_lea.hbm %s1, %s191
          %s193 = sadd.s32 5, %s103
          %s194 = scalar_lea.vmem [#allocation2], %s193
          %s195 = scalar_lea.sflag [#allocation3], %s193
          // Predicated region
          $region37: #{tpu_custom_call.1} parent=15 // pred_check
            _
          $region38: #{tpu_custom_call.1} parent=15 // pred_check_branch
            %197 = sbr.rel target = $region40
          $region39: #{tpu_custom_call.1} parent=15 // pred_region
            %198 = sst [smem:[#allocation10]] [#allocation21]
            %199 = sst [smem:[#allocation11]] [#allocation20]
          $region40: #{tpu_custom_call.1} parent=15 // pred_fallthru
            _
          %201 = shalt.err (0)
          %s203 = sshll.u32 %s194, 4
          %s204 = int_to_ptr.vmem [resolvable:$true] %s203
          %206 = dma.hbm_to_vmem [thread:$0]  %s192, 16, %s204, %s195
          %s207 = sadd.s32 %s99, 6
          %s208 = sld [smem:[#allocation5 + %s207]]
          %s209 = smul.addr %s208, 16
          %s210 = scalar_lea.hbm %s1, %s209
          %s211 = sadd.s32 6, %s103
          %s212 = scalar_lea.vmem [#allocation2], %s211
          %s213 = scalar_lea.sflag [#allocation3], %s211
          // Predicated region
          $region41: #{tpu_custom_call.1} parent=15 // pred_check
            _
          $region42: #{tpu_custom_call.1} parent=15 // pred_check_branch
            %215 = sbr.rel target = $region44
          $region43: #{tpu_custom_call.1} parent=15 // pred_region
            %216 = sst [smem:[#allocation10]] [#allocation23]
            %217 = sst [smem:[#allocation11]] [#allocation22]
          $region44: #{tpu_custom_call.1} parent=15 // pred_fallthru
            _
          %219 = shalt.err (0)
          %s221 = sshll.u32 %s212, 4
          %s222 = int_to_ptr.vmem [resolvable:$true] %s221
          %224 = dma.hbm_to_vmem [thread:$0]  %s210, 16, %s222, %s213
          %s225 = sadd.s32 %s99, 7
          %s226 = sld [smem:[#allocation5 + %s225]]
          %s227 = smul.addr %s226, 16
          %s228 = scalar_lea.hbm %s1, %s227
          %s229 = sadd.s32 7, %s103
          %s230 = scalar_lea.vmem [#allocation2], %s229
          %s231 = scalar_lea.sflag [#allocation3], %s229
          // Predicated region
          $region45: #{tpu_custom_call.1} parent=15 // pred_check
            _
          $region46: #{tpu_custom_call.1} parent=15 // pred_check_branch
            %233 = sbr.rel target = $region48
          $region47: #{tpu_custom_call.1} parent=15 // pred_region
            %234 = sst [smem:[#allocation10]] [#allocation25]
            %235 = sst [smem:[#allocation11]] [#allocation24]
          $region48: #{tpu_custom_call.1} parent=15 // pred_fallthru
            _
          %237 = shalt.err (0)
          %s239 = sshll.u32 %s230, 4
          %s240 = int_to_ptr.vmem [resolvable:$true] %s239
          %242 = dma.hbm_to_vmem [thread:$0]  %s228, 16, %s240, %s231
        $region16: #{tpu_custom_call.1} parent=11 // pred_fallthru
          _
        %p243 = scmp.lt.s32.totalorder %s82, 2
        // Predicated region
        $region49: #{tpu_custom_call.1} parent=11 // pred_check
          %p244 = pneg %p243
        $region50: #{tpu_custom_call.1} parent=11 // pred_check_branch
          %246 = sbr.rel (%p244) target = $region52
        $region51: #{tpu_custom_call.1} parent=11 // pred_region
          %s247 = sadd.s32 %s69, 1
          %s248 = smul.u32 %s247, 8
          %s249 = sld [smem:[#allocation5 + %s248]]
          %s250 = smul.addr %s249, 16
          %s251 = scalar_lea.hbm %s1, %s250
          %s252 = smul.u32 %s94, 8
          %s253 = scalar_lea.vmem [#allocation2], %s252
          %s254 = scalar_lea.sflag [#allocation3], %s252
          // Predicated region
          $region53: #{tpu_custom_call.1} parent=51 // pred_check
            _
          $region54: #{tpu_custom_call.1} parent=51 // pred_check_branch
            %256 = sbr.rel target = $region56
          $region55: #{tpu_custom_call.1} parent=51 // pred_region
            %257 = sst [smem:[#allocation10]] [#allocation27]
            %258 = sst [smem:[#allocation11]] [#allocation26]
          $region56: #{tpu_custom_call.1} parent=51 // pred_fallthru
            _
          %260 = shalt.err (0)
          %s262 = sshll.u32 %s253, 4
          %s263 = int_to_ptr.vmem [resolvable:$true] %s262
          %265 = dma.hbm_to_vmem [thread:$0]  %s251, 16, %s263, %s254
          %s266 = sadd.s32 %s248, 1
          %s267 = sld [smem:[#allocation5 + %s266]]
          %s268 = smul.addr %s267, 16
          %s269 = scalar_lea.hbm %s1, %s268
          %s270 = sadd.s32 1, %s252
          %s271 = scalar_lea.vmem [#allocation2], %s270
          %s272 = scalar_lea.sflag [#allocation3], %s270
          // Predicated region
          $region57: #{tpu_custom_call.1} parent=51 // pred_check
            _
          $region58: #{tpu_custom_call.1} parent=51 // pred_check_branch
            %274 = sbr.rel target = $region60
          $region59: #{tpu_custom_call.1} parent=51 // pred_region
            %275 = sst [smem:[#allocation10]] [#allocation29]
            %276 = sst [smem:[#allocation11]] [#allocation28]
          $region60: #{tpu_custom_call.1} parent=51 // pred_fallthru
            _
          %278 = shalt.err (0)
          %s280 = sshll.u32 %s271, 4
          %s281 = int_to_ptr.vmem [resolvable:$true] %s280
          %283 = dma.hbm_to_vmem [thread:$0]  %s269, 16, %s281, %s272
          %s284 = sadd.s32 %s248, 2
          %s285 = sld [smem:[#allocation5 + %s284]]
          %s286 = smul.addr %s285, 16
          %s287 = scalar_lea.hbm %s1, %s286
          %s288 = sadd.s32 2, %s252
          %s289 = scalar_lea.vmem [#allocation2], %s288
          %s290 = scalar_lea.sflag [#allocation3], %s288
          // Predicated region
          $region61: #{tpu_custom_call.1} parent=51 // pred_check
            _
          $region62: #{tpu_custom_call.1} parent=51 // pred_check_branch
            %292 = sbr.rel target = $region64
          $region63: #{tpu_custom_call.1} parent=51 // pred_region
            %293 = sst [smem:[#allocation10]] [#allocation31]
            %294 = sst [smem:[#allocation11]] [#allocation30]
          $region64: #{tpu_custom_call.1} parent=51 // pred_fallthru
            _
          %296 = shalt.err (0)
          %s298 = sshll.u32 %s289, 4
          %s299 = int_to_ptr.vmem [resolvable:$true] %s298
          %301 = dma.hbm_to_vmem [thread:$0]  %s287, 16, %s299, %s290
          %s302 = sadd.s32 %s248, 3
          %s303 = sld [smem:[#allocation5 + %s302]]
          %s304 = smul.addr %s303, 16
          %s305 = scalar_lea.hbm %s1, %s304
          %s306 = sadd.s32 3, %s252
          %s307 = scalar_lea.vmem [#allocation2], %s306
          %s308 = scalar_lea.sflag [#allocation3], %s306
          // Predicated region
          $region65: #{tpu_custom_call.1} parent=51 // pred_check
            _
          $region66: #{tpu_custom_call.1} parent=51 // pred_check_branch
            %310 = sbr.rel target = $region68
          $region67: #{tpu_custom_call.1} parent=51 // pred_region
            %311 = sst [smem:[#allocation10]] [#allocation33]
            %312 = sst [smem:[#allocation11]] [#allocation32]
          $region68: #{tpu_custom_call.1} parent=51 // pred_fallthru
            _
          %314 = shalt.err (0)
          %s316 = sshll.u32 %s307, 4
          %s317 = int_to_ptr.vmem [resolvable:$true] %s316
          %319 = dma.hbm_to_vmem [thread:$0]  %s305, 16, %s317, %s308
          %s320 = sadd.s32 %s248, 4
          %s321 = sld [smem:[#allocation5 + %s320]]
          %s322 = smul.addr %s321, 16
          %s323 = scalar_lea.hbm %s1, %s322
          %s324 = sadd.s32 4, %s252
          %s325 = scalar_lea.vmem [#allocation2], %s324
          %s326 = scalar_lea.sflag [#allocation3], %s324
          // Predicated region
          $region69: #{tpu_custom_call.1} parent=51 // pred_check
            _
          $region70: #{tpu_custom_call.1} parent=51 // pred_check_branch
            %328 = sbr.rel target = $region72
          $region71: #{tpu_custom_call.1} parent=51 // pred_region
            %329 = sst [smem:[#allocation10]] [#allocation35]
            %330 = sst [smem:[#allocation11]] [#allocation34]
          $region72: #{tpu_custom_call.1} parent=51 // pred_fallthru
            _
          %332 = shalt.err (0)
          %s334 = sshll.u32 %s325, 4
          %s335 = int_to_ptr.vmem [resolvable:$true] %s334
          %337 = dma.hbm_to_vmem [thread:$0]  %s323, 16, %s335, %s326
          %s338 = sadd.s32 %s248, 5
          %s339 = sld [smem:[#allocation5 + %s338]]
          %s340 = smul.addr %s339, 16
          %s341 = scalar_lea.hbm %s1, %s340
          %s342 = sadd.s32 5, %s252
          %s343 = scalar_lea.vmem [#allocation2], %s342
          %s344 = scalar_lea.sflag [#allocation3], %s342
          // Predicated region
          $region73: #{tpu_custom_call.1} parent=51 // pred_check
            _
          $region74: #{tpu_custom_call.1} parent=51 // pred_check_branch
            %346 = sbr.rel target = $region76
          $region75: #{tpu_custom_call.1} parent=51 // pred_region
            %347 = sst [smem:[#allocation10]] [#allocation37]
            %348 = sst [smem:[#allocation11]] [#allocation36]
          $region76: #{tpu_custom_call.1} parent=51 // pred_fallthru
            _
          %350 = shalt.err (0)
          %s352 = sshll.u32 %s343, 4
          %s353 = int_to_ptr.vmem [resolvable:$true] %s352
          %355 = dma.hbm_to_vmem [thread:$0]  %s341, 16, %s353, %s344
          %s356 = sadd.s32 %s248, 6
          %s357 = sld [smem:[#allocation5 + %s356]]
          %s358 = smul.addr %s357, 16
          %s359 = scalar_lea.hbm %s1, %s358
          %s360 = sadd.s32 6, %s252
          %s361 = scalar_lea.vmem [#allocation2], %s360
          %s362 = scalar_lea.sflag [#allocation3], %s360
          // Predicated region
          $region77: #{tpu_custom_call.1} parent=51 // pred_check
            _
          $region78: #{tpu_custom_call.1} parent=51 // pred_check_branch
            %364 = sbr.rel target = $region80
          $region79: #{tpu_custom_call.1} parent=51 // pred_region
            %365 = sst [smem:[#allocation10]] [#allocation39]
            %366 = sst [smem:[#allocation11]] [#allocation38]
          $region80: #{tpu_custom_call.1} parent=51 // pred_fallthru
            _
          %368 = shalt.err (0)
          %s370 = sshll.u32 %s361, 4
          %s371 = int_to_ptr.vmem [resolvable:$true] %s370
          %373 = dma.hbm_to_vmem [thread:$0]  %s359, 16, %s371, %s362
          %s374 = sadd.s32 %s248, 7
          %s375 = sld [smem:[#allocation5 + %s374]]
          %s376 = smul.addr %s375, 16
          %s377 = scalar_lea.hbm %s1, %s376
          %s378 = sadd.s32 7, %s252
          %s379 = scalar_lea.vmem [#allocation2], %s378
          %s380 = scalar_lea.sflag [#allocation3], %s378
          // Predicated region
          $region81: #{tpu_custom_call.1} parent=51 // pred_check
            _
          $region82: #{tpu_custom_call.1} parent=51 // pred_check_branch
            %382 = sbr.rel target = $region84
          $region83: #{tpu_custom_call.1} parent=51 // pred_region
            %383 = sst [smem:[#allocation10]] [#allocation41]
            %384 = sst [smem:[#allocation11]] [#allocation40]
          $region84: #{tpu_custom_call.1} parent=51 // pred_fallthru
            _
          %386 = shalt.err (0)
          %s388 = sshll.u32 %s379, 4
          %s389 = int_to_ptr.vmem [resolvable:$true] %s388
          %391 = dma.hbm_to_vmem [thread:$0]  %s377, 16, %s389, %s380
        $region52: #{tpu_custom_call.1} parent=11 // pred_fallthru
          _
        %s392 = smul.u32 %s81, 8
        %s393 = scalar_lea.sflag [#allocation3], %s392
        %s394 = smul.u32 1, 1
        %s395 = sshll.u32 %s394, 4
        %396 = dma.done %s393, %s395
        %s397 = sadd.s32 1, %s392
        %s398 = scalar_lea.sflag [#allocation3], %s397
        %s399 = sshll.u32 %s394, 4
        %400 = dma.done %s398, %s399
        %s401 = sadd.s32 2, %s392
        %s402 = scalar_lea.sflag [#allocation3], %s401
        %s403 = sshll.u32 %s394, 4
        %404 = dma.done %s402, %s403
        %s405 = sadd.s32 3, %s392
        %s406 = scalar_lea.sflag [#allocation3], %s405
        %s407 = sshll.u32 %s394, 4
        %408 = dma.done %s406, %s407
        %s409 = sadd.s32 4, %s392
        %s410 = scalar_lea.sflag [#allocation3], %s409
        %s411 = sshll.u32 %s394, 4
        %412 = dma.done %s410, %s411
        %s413 = sadd.s32 5, %s392
        %s414 = scalar_lea.sflag [#allocation3], %s413
        %s415 = sshll.u32 %s394, 4
        %416 = dma.done %s414, %s415
        %s417 = sadd.s32 6, %s392
        %s418 = scalar_lea.sflag [#allocation3], %s417
        %s419 = sshll.u32 %s394, 4
        %420 = dma.done %s418, %s419
        %s421 = sadd.s32 7, %s392
        %s422 = scalar_lea.sflag [#allocation3], %s421
        %s423 = sshll.u32 %s394, 4
        %424 = dma.done %s422, %s423
        %s425 = scalar_lea.vmem [#allocation2], %s392
        %v426 = vld [vmem:[%s425] sm:$0xff]
        %427 = vst [vmem:[%s65] sm:$0xff] %v426
        %s428 = sand.u32 %s38, 1
        %s429 = scalar_lea.sflag [#allocation7], %s428
        %s430 = sand.u32 %s38, 1
        %s431 = smul.addr %s430, 8
        %s432 = scalar_lea.vmem [#allocation6], %s431
        // Predicated region
        $region85: #{tpu_custom_call.1} parent=11 // pred_check
          %p433 = pneg %p44
        $region86: #{tpu_custom_call.1} parent=11 // pred_check_branch
          %435 = sbr.rel (%p433) target = $region88
        $region87: #{tpu_custom_call.1} parent=11 // pred_region
          %s436 = smul.u32 %s21, 2
          %s437 = sadd.s32 %s436, %s22
          %s439 = ssub.s32 128, 128
          %440 = vsyncadd %s429, %s439
          %s441 = smul.addr %s437, 128
          %s442 = scalar_lea.hbm %s2, %s441
          %s444 = sshll.u32 %s432, 4
          %s445 = int_to_ptr.vmem [resolvable:$true] %s444
          %447 = dma.vmem_to_hbm [thread:$0]  %s445, 128, %s442, %s429
        $region88: #{tpu_custom_call.1} parent=11 // pred_fallthru
          _
      $region12: #{tpu_custom_call.1} parent=5 // pred_fallthru
        _
      %p448 = scmp.le.s32.totalorder 1, %s15
      // Predicated region
      $region89: #{tpu_custom_call.1} parent=5 // pred_check
        %p449 = pneg %p448
      $region90: #{tpu_custom_call.1} parent=5 // pred_check_branch
        %451 = sbr.rel (%p449) target = $region92
      $region91: #{tpu_custom_call.1} parent=5 // pred_region
        %s452 = ssub.s32 %s15, 1
        // Predicated region
        $region93: #{tpu_custom_call.1} parent=91 // pred_check
          %p453 = pneg %p50
        $region94: #{tpu_custom_call.1} parent=91 // pred_check_branch
          %455 = sbr.rel (%p453) target = $region96
        $region95: #{tpu_custom_call.1} parent=91 // pred_region
          %s456 = sand.u32 %s41, 1
          %s457 = scalar_lea.sflag [#allocation7], %s456
          %s458 = sand.u32 %s41, 1
          %s459 = smul.addr %s458, 8
          %s460 = scalar_lea.vmem [#allocation6], %s459
          %461 = dma.done %s457, 128
        $region96: #{tpu_custom_call.1} parent=91 // pred_fallthru
          _
      $region92: #{tpu_custom_call.1} parent=5 // pred_fallthru
        _
    $region6: #{tpu_custom_call.1} parent=1 // loop_footer
      %s19 = sadd.s32 1, %s15
    $region7: #{tpu_custom_call.1} parent=1 // loop_footer_branch
      %14 = sbr.rel target = $region3
    $region8: #{tpu_custom_call.1} parent=1 // loop_exit
      _
    %462 = vsyncpa [#allocation7], 1
    %s463 = scalar_lea.sflag [#allocation7], 1
    %464 = vsyncpa %s463, 1
  %465 = vsyncmov [#allocation3]
  %s466 = vpop.sfrf %465
  %p467 = scmp.eq.s32.totalorder %s466, 0
  %p468 = pneg %p467
  %470 = shalt.err (%p468)
  %s471 = scalar_lea.sflag [#allocation3], 1
  %472 = vsyncmov %s471
  %s473 = vpop.sfrf %472
  %p474 = scmp.eq.s32.totalorder %s473, 0
  %p475 = pneg %p474
  %477 = shalt.err (%p475)
  %s478 = scalar_lea.sflag [#allocation3], 2
  %479 = vsyncmov %s478
  %s480 = vpop.sfrf %479
  %p481 = scmp.eq.s32.totalorder %s480, 0
  %p482 = pneg %p481
  %484 = shalt.err (%p482)
  %s485 = scalar_lea.sflag [#allocation3], 3
  %486 = vsyncmov %s485
  %s487 = vpop.sfrf %486
  %p488 = scmp.eq.s32.totalorder %s487, 0
  %p489 = pneg %p488
  %491 = shalt.err (%p489)
  %s492 = scalar_lea.sflag [#allocation3], 4
  %493 = vsyncmov %s492
  %s494 = vpop.sfrf %493
  %p495 = scmp.eq.s32.totalorder %s494, 0
  %p496 = pneg %p495
  %498 = shalt.err (%p496)
  %s499 = scalar_lea.sflag [#allocation3], 5
  %500 = vsyncmov %s499
  %s501 = vpop.sfrf %500
  %p502 = scmp.eq.s32.totalorder %s501, 0
  %p503 = pneg %p502
  %505 = shalt.err (%p503)
  %s506 = scalar_lea.sflag [#allocation3], 6
  %507 = vsyncmov %s506
  %s508 = vpop.sfrf %507
  %p509 = scmp.eq.s32.totalorder %s508, 0
  %p510 = pneg %p509
  %512 = shalt.err (%p510)
  %s513 = scalar_lea.sflag [#allocation3], 7
  %514 = vsyncmov %s513
  %s515 = vpop.sfrf %514
  %p516 = scmp.eq.s32.totalorder %s515, 0
  %p517 = pneg %p516
  %519 = shalt.err (%p517)
  %s520 = scalar_lea.sflag [#allocation3], 8
  %521 = vsyncmov %s520
  %s522 = vpop.sfrf %521
  %p523 = scmp.eq.s32.totalorder %s522, 0
  %p524 = pneg %p523
  %526 = shalt.err (%p524)
  %s527 = scalar_lea.sflag [#allocation3], 9
  %528 = vsyncmov %s527
  %s529 = vpop.sfrf %528
  %p530 = scmp.eq.s32.totalorder %s529, 0
  %p531 = pneg %p530
  %533 = shalt.err (%p531)
  %s534 = scalar_lea.sflag [#allocation3], 10
  %535 = vsyncmov %s534
  %s536 = vpop.sfrf %535
  %p537 = scmp.eq.s32.totalorder %s536, 0
  %p538 = pneg %p537
  %540 = shalt.err (%p538)
  %s541 = scalar_lea.sflag [#allocation3], 11
  %542 = vsyncmov %s541
  %s543 = vpop.sfrf %542
  %p544 = scmp.eq.s32.totalorder %s543, 0
  %p545 = pneg %p544
  %547 = shalt.err (%p545)
  %s548 = scalar_lea.sflag [#allocation3], 12
  %549 = vsyncmov %s548
  %s550 = vpop.sfrf %549
  %p551 = scmp.eq.s32.totalorder %s550, 0
  %p552 = pneg %p551
  %554 = shalt.err (%p552)
  %s555 = scalar_lea.sflag [#allocation3], 13
  %556 = vsyncmov %s555
  %s557 = vpop.sfrf %556
  %p558 = scmp.eq.s32.totalorder %s557, 0
  %p559 = pneg %p558
  %561 = shalt.err (%p559)
  %s562 = scalar_lea.sflag [#allocation3], 14
  %563 = vsyncmov %s562
  %s564 = vpop.sfrf %563
  %p565 = scmp.eq.s32.totalorder %s564, 0
  %p566 = pneg %p565
  %568 = shalt.err (%p566)
  %s569 = scalar_lea.sflag [#allocation3], 15
  %570 = vsyncmov %s569
  %s571 = vpop.sfrf %570
  %p572 = scmp.eq.s32.totalorder %s571, 0
  %p573 = pneg %p572
  %575 = shalt.err (%p573)

</llo_original>
